<compile_context>
chip_gen: v7x
topology: tpu7x:2x2x1
jax: 0.10.0
libtpu: 0.0.40
codegen_flags: <defaults>
</compile_context>

<pallas_src>
import math
from functools import partial

import jax
import jax.numpy as jnp
from jax import lax
from jax.experimental import pallas as pl
from jax.experimental.pallas import tpu as pltpu


def _round_up(x, m):
    return ((x + m - 1) // m) * m


def _pick_batch_tile(B, per_item_bytes, budget_bytes=24 << 20):
    """Largest TB dividing B that fits a double-buffered VMEM budget and still
    leaves >= 2 grid steps (so a v7x chip can shard the 'parallel' axis over
    both TensorCores)."""
    best = 1
    for tb in range(1, B + 1):
        if B % tb:
            continue
        if B >= 2 and B // tb < 2:
            continue
        if 2 * tb * per_item_bytes > budget_bytes:
            continue
        best = max(best, tb)
    return best


def _pick_row_tile(B):
    for t in (512, 256, 128, 64, 32, 16, 8):
        if B % t == 0:
            return t
    return B  # small / odd B: single resident block


# ---------------------------------------------------------------------------
# Kernel 1: batched scoring  (qembs @ dembs^T  +  max over segments)
#   blocks: q (TB, Sp, Hp), d (TB, Cp, Hp) -> scores (TB, Sp, Cp), logits (TB, 1, Cp)
# ---------------------------------------------------------------------------
def _score_kernel(q_ref, d_ref, scores_ref, logits_ref, *,
                  s_valid, s_padded, compute_dtype):
    q = q_ref[...].astype(compute_dtype)          # (TB, Sp, Hp)
    d = d_ref[...].astype(compute_dtype)          # (TB, Cp, Hp)
    # Batched contraction over H; no explicit transpose of d (MXU consumes it).
    s = jnp.einsum("bsh,bch->bsc", q, d,
                   preferred_element_type=jnp.float32)          # (TB, Sp, Cp) f32
    scores_ref[...] = s.astype(scores_ref.dtype)
    # torch.max(all_scores, 1).values; padded segment rows must not win the max.
    if s_valid < s_padded:
        seg = lax.broadcasted_iota(jnp.int32, s.shape, 1)
        s = jnp.where(seg < s_valid, s, -jnp.inf)
    logits_ref[...] = jnp.max(s, axis=1, keepdims=True).astype(logits_ref.dtype)


def reranker_scores(qembs, dembs, *, compute_dtype=jnp.bfloat16):
    B, S, H = qembs.shape
    _, C, _ = dembs.shape
    Sp = _round_up(S, 8)      # sublane-dense
    Cp = _round_up(C, 128)    # lane-dense outputs -> unmasked vst
    Hp = _round_up(H, 128)    # full MXU contraction lanes

    q_p = jnp.pad(qembs, ((0, 0), (0, Sp - S), (0, Hp - H)))
    d_p = jnp.pad(dembs, ((0, 0), (0, Cp - C), (0, Hp - H)))

    # Conservative (f32) per-item working set: q + d tiles + both outputs.
    per_item_bytes = 4 * (Sp * Hp + Cp * Hp + Sp * Cp + Cp)
    TB = _pick_batch_tile(B, per_item_bytes)
    # TODO(synk): for very large S*C (won't happen with n_max_candidates~10) add a
    # grid axis over C with a running-max accumulator (pl.when init/finalize).

    scores_p, logits_p = pl.pallas_call(
        partial(_score_kernel, s_valid=S, s_padded=Sp, compute_dtype=compute_dtype),
        out_shape=(jax.ShapeDtypeStruct((B, Sp, Cp), jnp.float32),
                   jax.ShapeDtypeStruct((B, 1, Cp), jnp.float32)),
        grid=(B // TB,),
        in_specs=[pl.BlockSpec((TB, Sp, Hp), lambda b: (b, 0, 0)),
                  pl.BlockSpec((TB, Cp, Hp), lambda b: (b, 0, 0))],
        out_specs=(pl.BlockSpec((TB, Sp, Cp), lambda b: (b, 0, 0)),
                   pl.BlockSpec((TB, 1, Cp), lambda b: (b, 0, 0))),
        compiler_params=pltpu.CompilerParams(
            dimension_semantics=("parallel",),
            vmem_limit_bytes=48 * 1024 * 1024),
    )(q_p, d_p)

    all_scores = scores_p[:, :S, :C]      # drop padded segments / candidates
    logits = logits_p[:, 0, :C]
    return all_scores, logits


# ---------------------------------------------------------------------------
# Kernel 2: in-batch contrastive (infoNCE) loss, row-tiled over the batch.
#   rel = (q0 @ d0^T) / tau ; loss = mean_i [ logsumexp_j rel[i,j] - rel[i,i] ]
# ---------------------------------------------------------------------------
def _infonce_kernel(q_ref, d_ref, loss_ref, *, inv_tau, inv_batch, row_tile,
                    compute_dtype):
    i = pl.program_id(0)

    @pl.when(i == 0)
    def _():
        loss_ref[...] = jnp.zeros_like(loss_ref)

    q = q_ref[...].astype(compute_dtype)          # (TB, H)
    d = d_ref[...].astype(compute_dtype)          # (B, H)
    # Contract on the shared H axis directly (no d.T materialization).
    rel = lax.dot_general(q, d, (((1,), (1,)), ((), ())),
                          preferred_element_type=jnp.float32) * inv_tau   # (TB, B)
    m = jnp.max(rel, axis=-1, keepdims=True)
    lse = m + jnp.log(jnp.sum(jnp.exp(rel - m), axis=-1, keepdims=True))  # (TB, 1)

    # Diagonal entries for this row tile: elementwise mul + lane reduce
    # (no (B,B) iota/where masks).
    start = pl.multiple_of(i * row_tile, row_tile)
    d_diag = d_ref[pl.ds(start, row_tile), :].astype(compute_dtype)       # (TB, H)
    diag = jnp.sum(q.astype(jnp.float32) * d_diag.astype(jnp.float32),
                   axis=-1, keepdims=True) * inv_tau                      # (TB, 1)

    loss_ref[...] = loss_ref[...] + jnp.sum(lse - diag) * inv_batch


def infonce_loss(q0, d0, tau, *, compute_dtype=jnp.bfloat16):
    B, H = q0.shape
    TB = _pick_row_tile(B)
    loss = pl.pallas_call(
        partial(_infonce_kernel, inv_tau=float(1.0 / tau),
                inv_batch=float(1.0 / B), row_tile=TB,
                compute_dtype=compute_dtype),
        out_shape=jax.ShapeDtypeStruct((1, 1), jnp.float32),
        grid=(B // TB,),
        in_specs=[pl.BlockSpec((TB, H), lambda i: (i, 0)),
                  pl.BlockSpec((B, H), lambda i: (0, 0))],
        out_specs=pl.BlockSpec((1, 1), lambda i: (0, 0)),
        compiler_params=pltpu.CompilerParams(
            dimension_semantics=("arbitrary",)),
    )(q0, d0)
    return loss[0, 0]


# ---------------------------------------------------------------------------
# Module-level forward (mirrors AdaptiveReranker.forward after the encoders)
# ---------------------------------------------------------------------------
def adaptive_reranker_forward(qembs, dembs, *, tau=1.0, do_contrastive=True,
                              compute_dtype=jnp.bfloat16):
    all_scores, logits = reranker_scores(qembs, dembs, compute_dtype=compute_dtype)
    # ranking = (-scores).argsort(-1): index-sort glue, no clean Pallas equivalent
    ranking = jnp.argsort(-logits, axis=-1)
    loss_r = jnp.float32(0.0)
    if do_contrastive:
        loss_r = infonce_loss(qembs[:, 0, :], dembs[:, 0, :], tau,
                              compute_dtype=compute_dtype)
    return {
        "qembs": qembs,
        "loss": loss_r,
        "logits": logits,
        "all_scores": all_scores,
        "ranking": ranking,
        "logs": {"infoNCE": loss_r},
    }


def init_vhead_params(n_max_candidates=10):
    # RankingValueHead params exist in __init__ but are NOT used in forward();
    # initialized deterministically for completeness only.
    k1, k2 = jax.random.split(jax.random.PRNGKey(42))
    return {
        "fc1_w": jax.random.normal(k1, (768, n_max_candidates), jnp.float32) * 0.02,
        "fc1_b": jnp.zeros((768,), jnp.float32),
        "fc2_w": jax.random.normal(k2, (1, 768), jnp.float32) * 0.02,
        "fc2_b": jnp.zeros((1,), jnp.float32),
    }


if __name__ == "__main__":
    # TODO(synk): q_encoder / d_encoder are external transformer encoders; the
    # kernels consume their output embeddings directly (generated synthetically).
    B, S, C, H = 2, 4, 8, 32  # batch, query segments, candidates, hidden
    tau = 0.1
    key = jax.random.PRNGKey(0)
    kq, kd = jax.random.split(key)
    qembs = jax.random.normal(kq, (B, S, H), jnp.float32)
    dembs = jax.random.normal(kd, (B, C, H), jnp.float32)
    _ = init_vhead_params(n_max_candidates=10)  # unused in forward, kept for parity

    compute_dtype = jnp.bfloat16  # MXU-friendly; f32 accumulation in-kernel
    out = adaptive_reranker_forward(qembs, dembs, tau=tau, do_contrastive=True,
                                    compute_dtype=compute_dtype)
    out = jax.block_until_ready(out)

    # Pure-JAX reference on the same bf16-rounded operands the MXU consumes.
    qr = qembs.astype(compute_dtype).astype(jnp.float32)
    dr = dembs.astype(compute_dtype).astype(jnp.float32)
    ref_scores = jnp.einsum("bsh,bch->bsc", qr, dr)
    ref_logits = jnp.max(ref_scores, axis=1)
    ref_ranking = jnp.argsort(-ref_logits, axis=-1)
    rel = (qr[:, 0, :] / tau) @ dr[:, 0, :].T
    ref_loss = jnp.mean(jax.nn.logsumexp(rel, axis=-1) - jnp.diagonal(rel))

    assert out["all_scores"].shape == (B, S, C)
    assert out["logits"].shape == (B, C)
    assert jnp.allclose(out["all_scores"], ref_scores, atol=5e-2, rtol=1e-2)
    assert jnp.allclose(out["logits"], ref_logits, atol=5e-2, rtol=1e-2)
    assert jnp.array_equal(out["ranking"], ref_ranking)
    assert jnp.allclose(out["loss"], ref_loss, atol=5e-2, rtol=1e-2)

    print("KERNEL_OK")
</pallas_src>

<mosaic_0001>
module attributes {stable_mosaic.version = 11 : i64} {
  func.func @_score_kernel(%arg0: i32, %arg1: memref<1x8x128xf32, #tpu.memory_space<vmem>>, %arg2: memref<1x128x128xf32, #tpu.memory_space<vmem>>, %arg3: memref<1x8x128xf32, #tpu.memory_space<vmem>>, %arg4: memref<1x1x128xf32, #tpu.memory_space<vmem>>) attributes {dimension_semantics = [#tpu.dimension_semantics<parallel>], iteration_bounds = array<i64: 2>, scalar_prefetch = 0 : i64, scratch_operands = 0 : i64, tpu.core_type = #tpu.core_type<tc>, window_params = [{transform_indices = @transform_0, window_bounds = array<i64: 1, 8, 128>}, {transform_indices = @transform_1, window_bounds = array<i64: 1, 128, 128>}, {transform_indices = @transform_2, window_bounds = array<i64: 1, 8, 128>}, {transform_indices = @transform_3, window_bounds = array<i64: 1, 1, 128>}]} {
    %c0 = arith.constant 0 : index
    %c0_0 = arith.constant 0 : index
    %c0_1 = arith.constant 0 : index
    %0 = vector.load %arg1[%c0, %c0_0, %c0_1] : memref<1x8x128xf32, #tpu.memory_space<vmem>>, vector<1x8x128xf32>
    %1 = arith.truncf %0 : vector<1x8x128xf32> to vector<1x8x128xbf16>
    %c0_2 = arith.constant 0 : index
    %c0_3 = arith.constant 0 : index
    %c0_4 = arith.constant 0 : index
    %2 = vector.load %arg2[%c0_2, %c0_3, %c0_4] : memref<1x128x128xf32, #tpu.memory_space<vmem>>, vector<1x128x128xf32>
    %3 = arith.truncf %2 : vector<1x128x128xf32> to vector<1x128x128xbf16>
    "tpu.trace_start"() <{level = 10 : i32, message = "bsh,bch->bsc"}> : () -> ()
    %cst = arith.constant dense<0.000000e+00> : vector<1x8x128xf32>
    %4 = tpu.matmul %1, %3, %cst {dimension_numbers = #tpu.dot_dimension_numbers<[2], [2], [1], [1], [0, 0, 0, 1, 1, 1], [0], [0]>} : vector<1x8x128xbf16>, vector<1x128x128xbf16>, vector<1x8x128xf32> -> vector<1x8x128xf32>
    "tpu.trace_stop"() : () -> ()
    %c0_5 = arith.constant 0 : index
    %c0_6 = arith.constant 0 : index
    %c0_7 = arith.constant 0 : index
    %5 = vector.load %arg3[%c0_5, %c0_6, %c0_7] : memref<1x8x128xf32, #tpu.memory_space<vmem>>, vector<1x8x128xf32>
    tpu.vector_store %arg3[%c0_5, %c0_6, %c0_7], %4 {strides = array<i32>} : memref<1x8x128xf32, #tpu.memory_space<vmem>>, vector<1x8x128xf32>,
    %6 = tpu.iota {dimensions = array<i32: 1>} : vector<1x8x128xi32>
    %c4_i32 = arith.constant 4 : i32
    %7 = vector.broadcast %c4_i32 : i32 to vector<1x8x128xi32>
    %8 = arith.cmpi slt, %6, %7 : vector<1x8x128xi32>
    %cst_8 = arith.constant 0xFF800000 : f32
    %9 = vector.broadcast %cst_8 : f32 to vector<1x8x128xf32>
    %10 = arith.select %8, %4, %9 : vector<1x8x128xi1>, vector<1x8x128xf32>
    %cst_9 = arith.constant dense<0xFF800000> : vector<1x128xf32>
    %11 = vector.multi_reduction <maximumf>, %10, %cst_9 [1] : vector<1x8x128xf32> to vector<1x128xf32>
    %12 = vector.shape_cast %11 : vector<1x128xf32> to vector<1x1x128xf32>
    %c0_10 = arith.constant 0 : index
    %c0_11 = arith.constant 0 : index
    %c0_12 = arith.constant 0 : index
    %13 = vector.load %arg4[%c0_10, %c0_11, %c0_12] : memref<1x1x128xf32, #tpu.memory_space<vmem>>, vector<1x1x128xf32>
    tpu.vector_store %arg4[%c0_10, %c0_11, %c0_12], %12 {strides = array<i32>} : memref<1x1x128xf32, #tpu.memory_space<vmem>>, vector<1x1x128xf32>,
    return
  }
  func.func @transform_0(%arg0: i32) -> (i32, i32, i32) {
    %c0_i32 = arith.constant 0 : i32
    %c0_i32_0 = arith.constant 0 : i32
    %c0_i32_1 = arith.constant 0 : i32
    return %arg0, %c0_i32, %c0_i32_0 : i32, i32, i32
  }
  func.func @transform_1(%arg0: i32) -> (i32, i32, i32) {
    %c0_i32 = arith.constant 0 : i32
    %c0_i32_0 = arith.constant 0 : i32
    %c0_i32_1 = arith.constant 0 : i32
    return %arg0, %c0_i32, %c0_i32_0 : i32, i32, i32
  }
  func.func @transform_2(%arg0: i32) -> (i32, i32, i32) {
    %c0_i32 = arith.constant 0 : i32
    %c0_i32_0 = arith.constant 0 : i32
    %c0_i32_1 = arith.constant 0 : i32
    return %arg0, %c0_i32, %c0_i32_0 : i32, i32, i32
  }
  func.func @transform_3(%arg0: i32) -> (i32, i32, i32) {
    %c0_i32 = arith.constant 0 : i32
    %c0_i32_0 = arith.constant 0 : i32
    %c0_i32_1 = arith.constant 0 : i32
    return %arg0, %c0_i32, %c0_i32_0 : i32, i32, i32
  }
}

</mosaic_0001>

<llo_original>
// kernel: tpu_custom_call.1
$region0: #{tpu_custom_call.1}
  #allocation0 [shape = 'u32[]', space=smem, size = 0x4, offset = 0x4, fixed_abs, tag = 'smem constant byte address 0x4 - core index']
  #allocation1 [shape = 'u32[144,128]{1,0:T(1,128)}', space=vmem, size = 0x12000, scoped, tag = 'internal scratch']
  %s0 = inlined_call_operand.hbm [shape: f32[2,8,128], index: 0, kind: input, shape index: {}]
  %s1 = inlined_call_operand.hbm [shape: f32[2,128,128], index: 1, kind: input, shape index: {}]
  %s2 = inlined_call_operand.hbm [shape: f32[2,8,128], index: 2, kind: output, shape index: {0}]
  %s3 = inlined_call_operand.hbm [shape: f32[2,1,128], index: 3, kind: output, shape index: {1}]
  %4 = xla_tuple %s2, %s3
  %s5 = sld [smem:[#allocation0]]
  $region57: #{tpu_custom_call.1} parent=0
    _
  %s7 = ssub.s32 1, %s5
  %s8 = scalar_select 0, %s7, %s5
  $region1: #{tpu_custom_call.1} parent=0
    #allocation2 [shape = 'u8[8192]{0}', space=vmem, size = 0x2000, scoped, tag = 'input window, operand 0']
    #allocation3 [shape = 's32[2]{0}', space=sflag, size = 0x8, scoped, tag = 'scoped memory for tpu_custom_call.1']
    #allocation4 [shape = 's32[2]{0}', space=sflag, size = 0x8, scoped, tag = 'scoped memory for tpu_custom_call.1']
    #allocation5 [shape = 'u8[131072]{0}', space=vmem, size = 0x20000, scoped, tag = 'input window, operand 1']
    #allocation6 [shape = 's32[2]{0}', space=sflag, size = 0x8, scoped, tag = 'scoped memory for tpu_custom_call.1']
    #allocation7 [shape = 'u8[8192]{0}', space=vmem, size = 0x2000, scoped, tag = 'output window, operand 0']
    #allocation8 [shape = 'u8[1024]{0}', space=vmem, size = 0x400, scoped, tag = 'output window, operand 1']
    #allocation9 [shape = 's32[2]{0}', space=sflag, size = 0x8, scoped, tag = 'scoped memory for tpu_custom_call.1']
    %9 = vsyncpa [#allocation3], 0
    %s10 = scalar_lea.sflag [#allocation3], 1
    %11 = vsyncpa %s10, 0
    %12 = vsyncpa [#allocation6], 0
    %s13 = scalar_lea.sflag [#allocation6], 1
    %14 = vsyncpa %s13, 0
    %15 = vsyncpa [#allocation4], 0
    %s16 = scalar_lea.sflag [#allocation4], 1
    %17 = vsyncpa %s16, 0
    %18 = vsyncpa [#allocation9], 0
    %s19 = scalar_lea.sflag [#allocation9], 1
    %20 = vsyncpa %s19, 0
    loop: start=0, step=1, limit=4
    $region2: #{tpu_custom_call.1} parent=1 // loop_pre_header
      _
    $region3: #{tpu_custom_call.1} parent=1 // loop_header
      %s22 = sphi 0, %s26
      %p23 = scmp.ge.s32.totalorder %s22, 4
      %s32 = sphi 0, %s34
      %s35 = sphi 0, %s32
      %s36 = sphi 0, %s35
      %s52 = sphi 0, %s36
      %s58 = sphi 0, %s60
      %s61 = sphi 0, %s58
      %s62 = sphi 0, %s61
      %s78 = sphi 0, %s62
      %s84 = sphi 0, %s86
      %s87 = sphi 0, %s84
      %s88 = sphi 0, %s87
      %s104 = sphi 0, %s88
      %s110 = sphi 0, %s112
      %s113 = sphi 0, %s110
      %s114 = sphi 0, %s113
      %s130 = sphi 0, %s114
    $region4: #{tpu_custom_call.1} parent=1 // loop_header_branch
      %25 = sbr.rel (%p23) target = $region8
    $region5: #{tpu_custom_call.1} parent=1 // loop_body
      %s27 = ssub.s32 %s22, 1
      %s28 = ssub.s32 %s22, 2
      %s29 = sadd.s32 %s22, 1
      %s30 = ssub.s32 %s22, %s29
      %p31 = scmp.eq.s32.totalorder %s30, 0
      %s33 = sadd.s32 %s32, 1
      %s34 = scalar_select %p31, %s32, %s33
      %p37 = pneg %p31
      %p38 = scmp.eq.s32.totalorder %s22, 1
      %p39 = por %p37, %p38
      %p40 = scmp.ne.s32.totalorder %s32, %s35
      %p41 = scmp.eq.s32.totalorder %s22, 0
      %p42 = por %p40, %p41
      %p43 = scmp.ne.s32.totalorder %s32, %s35
      %p44 = scmp.eq.s32.totalorder %s27, 1
      %p45 = por %p43, %p44
      %p46 = scmp.ne.s32.totalorder %s35, %s36
      %p47 = scmp.eq.s32.totalorder %s27, 0
      %p48 = por %p46, %p47
      %p49 = scmp.ne.s32.totalorder %s35, %s36
      %p50 = scmp.eq.s32.totalorder %s28, 1
      %p51 = por %p49, %p50
      %p53 = scmp.ne.s32.totalorder %s36, %s52
      %p54 = scmp.eq.s32.totalorder %s28, 0
      %p55 = por %p53, %p54
      %s56 = ssub.s32 %s22, %s29
      %p57 = scmp.eq.s32.totalorder %s56, 0
      %s59 = sadd.s32 %s58, 1
      %s60 = scalar_select %p57, %s58, %s59
      %p63 = pneg %p57
      %p64 = scmp.eq.s32.totalorder %s22, 1
      %p65 = por %p63, %p64
      %p66 = scmp.ne.s32.totalorder %s58, %s61
      %p67 = scmp.eq.s32.totalorder %s22, 0
      %p68 = por %p66, %p67
      %p69 = scmp.ne.s32.totalorder %s58, %s61
      %p70 = scmp.eq.s32.totalorder %s27, 1
      %p71 = por %p69, %p70
      %p72 = scmp.ne.s32.totalorder %s61, %s62
      %p73 = scmp.eq.s32.totalorder %s27, 0
      %p74 = por %p72, %p73
      %p75 = scmp.ne.s32.totalorder %s61, %s62
      %p76 = scmp.eq.s32.totalorder %s28, 1
      %p77 = por %p75, %p76
      %p79 = scmp.ne.s32.totalorder %s62, %s78
      %p80 = scmp.eq.s32.totalorder %s28, 0
      %p81 = por %p79, %p80
      %s82 = ssub.s32 %s22, %s29
      %p83 = scmp.eq.s32.totalorder %s82, 0
      %s85 = sadd.s32 %s84, 1
      %s86 = scalar_select %p83, %s84, %s85
      %p89 = pneg %p83
      %p90 = scmp.eq.s32.totalorder %s22, 1
      %p91 = por %p89, %p90
      %p92 = scmp.ne.s32.totalorder %s84, %s87
      %p93 = scmp.eq.s32.totalorder %s22, 0
      %p94 = por %p92, %p93
      %p95 = scmp.ne.s32.totalorder %s84, %s87
      %p96 = scmp.eq.s32.totalorder %s27, 1
      %p97 = por %p95, %p96
      %p98 = scmp.ne.s32.totalorder %s87, %s88
      %p99 = scmp.eq.s32.totalorder %s27, 0
      %p100 = por %p98, %p99
      %p101 = scmp.ne.s32.totalorder %s87, %s88
      %p102 = scmp.eq.s32.totalorder %s28, 1
      %p103 = por %p101, %p102
      %p105 = scmp.ne.s32.totalorder %s88, %s104
      %p106 = scmp.eq.s32.totalorder %s28, 0
      %p107 = por %p105, %p106
      %s108 = ssub.s32 %s22, %s29
      %p109 = scmp.eq.s32.totalorder %s108, 0
      %s111 = sadd.s32 %s110, 1
      %s112 = scalar_select %p109, %s110, %s111
      %p115 = pneg %p109
      %p116 = scmp.eq.s32.totalorder %s22, 1
      %p117 = por %p115, %p116
      %p118 = scmp.ne.s32.totalorder %s110, %s113
      %p119 = scmp.eq.s32.totalorder %s22, 0
      %p120 = por %p118, %p119
      %p121 = scmp.ne.s32.totalorder %s110, %s113
      %p122 = scmp.eq.s32.totalorder %s27, 1
      %p123 = por %p121, %p122
      %p124 = scmp.ne.s32.totalorder %s113, %s114
      %p125 = scmp.eq.s32.totalorder %s27, 0
      %p126 = por %p124, %p125
      %p127 = scmp.ne.s32.totalorder %s113, %s114
      %p128 = scmp.eq.s32.totalorder %s28, 1
      %p129 = por %p127, %p128
      %p131 = scmp.ne.s32.totalorder %s114, %s130
      %p132 = scmp.eq.s32.totalorder %s28, 0
      %p133 = por %p131, %p132
      %p134 = scmp.le.s32.totalorder 1, %s22
      %p135 = scmp.lt.s32.totalorder %s22, 3
      %p136 = pnand %p134, %p135
      %p137 = pneg %p136
      // Predicated region
      $region9: #{tpu_custom_call.1} parent=5 // pred_check
        _
      $region10: #{tpu_custom_call.1} parent=5 // pred_check_branch
        %139 = sbr.rel (%p136) target = $region12
      $region11: #{tpu_custom_call.1} parent=5 // pred_region
        %s140 = ssub.s32 %s22, 1
      $region12: #{tpu_custom_call.1} parent=5 // pred_fallthru
        _
      %p141 = scmp.lt.s32.totalorder %s22, 2
      // Predicated region
      $region13: #{tpu_custom_call.1} parent=5 // pred_check
        %p142 = pneg %p141
      $region14: #{tpu_custom_call.1} parent=5 // pred_check_branch
        %144 = sbr.rel (%p142) target = $region16
      $region15: #{tpu_custom_call.1} parent=5 // pred_region
        // Predicated region
        $region17: #{tpu_custom_call.1} parent=15 // pred_check
          %p145 = pneg %p42
        $region18: #{tpu_custom_call.1} parent=15 // pred_check_branch
          %147 = sbr.rel (%p145) target = $region20
        $region19: #{tpu_custom_call.1} parent=15 // pred_region
          %s148 = sand.u32 %s32, 1
          %s149 = scalar_lea.sflag [#allocation3], %s148
          %s150 = sand.u32 %s32, 1
          %s151 = smul.addr %s150, 8
          %s152 = scalar_lea.vmem [#allocation2], %s151
          %s154 = ssub.s32 128, 128
          %155 = vsyncadd %s149, %s154
          %s156 = smul.addr %s22, 128
          %s157 = scalar_lea.hbm %s0, %s156
          %s159 = sshll.u32 %s152, 4
          %s160 = int_to_ptr.vmem [resolvable:$true] %s159
          %162 = dma.hbm_to_vmem [thread:$0]  %s157, 128, %s160, %s149
        $region20: #{tpu_custom_call.1} parent=15 // pred_fallthru
          _
        // Predicated region
        $region21: #{tpu_custom_call.1} parent=15 // pred_check
          %p163 = pneg %p68
        $region22: #{tpu_custom_call.1} parent=15 // pred_check_branch
          %165 = sbr.rel (%p163) target = $region24
        $region23: #{tpu_custom_call.1} parent=15 // pred_region
          %s166 = sand.u32 %s58, 1
          %s167 = scalar_lea.sflag [#allocation6], %s166
          %s168 = sand.u32 %s58, 1
          %s169 = smul.addr %s168, 128
          %s170 = scalar_lea.vmem [#allocation5], %s169
          %s172 = ssub.s32 2048, 2048
          %173 = vsyncadd %s167, %s172
          %s174 = smul.addr %s22, 16
          %s175 = smul.addr %s174, 128
          %s176 = scalar_lea.hbm %s1, %s175
          %s177 = sshll.u32 %s170, 4
          %s178 = int_to_ptr.vmem [resolvable:$true] %s177
          %183 = dma.hbm_to_vmem [thread:$0]  %s176, 2048, %s178, %s167, 128, 128, 8
        $region24: #{tpu_custom_call.1} parent=15 // pred_fallthru
          _
      $region16: #{tpu_custom_call.1} parent=5 // pred_fallthru
        _
      %p184 = scmp.le.s32.totalorder 1, %s22
      %p185 = scmp.lt.s32.totalorder %s22, 3
      %p186 = pnand %p184, %p185
      %p187 = pneg %p186
      // Predicated region
      $region25: #{tpu_custom_call.1} parent=5 // pred_check
        _
      $region26: #{tpu_custom_call.1} parent=5 // pred_check_branch
        %189 = sbr.rel (%p186) target = $region28
      $region27: #{tpu_custom_call.1} parent=5 // pred_region
        %s190 = ssub.s32 %s22, 1
        %s191 = sand.u32 %s35, 1
        %s192 = scalar_lea.sflag [#allocation3], %s191
        %s193 = sand.u32 %s35, 1
        %s194 = smul.addr %s193, 8
        %s195 = scalar_lea.vmem [#allocation2], %s194
        // Predicated region
        $region29: #{tpu_custom_call.1} parent=27 // pred_check
          %p196 = pneg %p48
        $region30: #{tpu_custom_call.1} parent=27 // pred_check_branch
          %198 = sbr.rel (%p196) target = $region32
        $region31: #{tpu_custom_call.1} parent=27 // pred_region
          %199 = dma.done %s192, 128
        $region32: #{tpu_custom_call.1} parent=27 // pred_fallthru
          _
        %s200 = sand.u32 %s61, 1
        %s201 = scalar_lea.sflag [#allocation6], %s200
        %s202 = sand.u32 %s61, 1
        %s203 = smul.addr %s202, 128
        %s204 = scalar_lea.vmem [#allocation5], %s203
        // Predicated region
        $region33: #{tpu_custom_call.1} parent=27 // pred_check
          %p205 = pneg %p74
        $region34: #{tpu_custom_call.1} parent=27 // pred_check_branch
          %207 = sbr.rel (%p205) target = $region36
        $region35: #{tpu_custom_call.1} parent=27 // pred_region
          %208 = dma.done %s201, 2048
        $region36: #{tpu_custom_call.1} parent=27 // pred_fallthru
          _
        %s209 = sand.u32 %s35, 1
        %s210 = scalar_lea.sflag [#allocation3], %s209
        %s211 = sand.u32 %s35, 1
        %s212 = smul.addr %s211, 8
        %s213 = scalar_lea.vmem [#allocation2], %s212
        %p214 = pneg %p48
        %p215 = pneg %p45
        %s216 = sand.u32 %s61, 1
        %s217 = scalar_lea.sflag [#allocation6], %s216
        %s218 = sand.u32 %s61, 1
        %s219 = smul.addr %s218, 128
        %s220 = scalar_lea.vmem [#allocation5], %s219
        %p221 = pneg %p74
        %p222 = pneg %p71
        %p223 = pneg %p100
        %p224 = pneg %p97
        %s225 = sand.u32 %s87, 1
        %s226 = scalar_lea.sflag [#allocation4], %s225
        %s227 = sand.u32 %s87, 1
        %s228 = smul.addr %s227, 8
        %s229 = scalar_lea.vmem [#allocation7], %s228
        %p230 = pneg %p126
        %p231 = pneg %p123
        %s232 = sand.u32 %s113, 1
        %s233 = scalar_lea.sflag [#allocation9], %s232
        %s234 = sand.u32 %s113, 1
        %s235 = scalar_lea.vmem [#allocation8], %s234
        %v237 = vld [vmem:[%s195] sm:$0xff]
        %v238 = vpack.c.bf16 %v237, %v237
        %v239 = vld [vmem:[%s204] sm:$0xff]
        %v240 = vld [vmem:[%s204 + $0x8] sm:$0xff]
        %v241 = vld [vmem:[%s204 + $0x10] sm:$0xff]
        %v242 = vld [vmem:[%s204 + $0x18] sm:$0xff]
        %v243 = vld [vmem:[%s204 + $0x20] sm:$0xff]
        %v244 = vld [vmem:[%s204 + $0x28] sm:$0xff]
        %v245 = vld [vmem:[%s204 + $0x30] sm:$0xff]
        %v246 = vld [vmem:[%s204 + $0x38] sm:$0xff]
        %v247 = vld [vmem:[%s204 + $0x40] sm:$0xff]
        %v248 = vld [vmem:[%s204 + $0x48] sm:$0xff]
        %v249 = vld [vmem:[%s204 + $0x50] sm:$0xff]
        %v250 = vld [vmem:[%s204 + $0x58] sm:$0xff]
        %v251 = vld [vmem:[%s204 + $0x60] sm:$0xff]
        %v252 = vld [vmem:[%s204 + $0x68] sm:$0xff]
        %v253 = vld [vmem:[%s204 + $0x70] sm:$0xff]
        %v254 = vld [vmem:[%s204 + $0x78] sm:$0xff]
        %v255 = vpack.c.bf16 %v240, %v239
        %v256 = vpack.c.bf16 %v242, %v241
        %v257 = vpack.c.bf16 %v244, %v243
        %v258 = vpack.c.bf16 %v246, %v245
        %v259 = vpack.c.bf16 %v248, %v247
        %v260 = vpack.c.bf16 %v250, %v249
        %v261 = vpack.c.bf16 %v252, %v251
        %v262 = vpack.c.bf16 %v254, %v253
        %263 = vmatprep.subr.bf16.mxu0 0
        %264 = vmatpush1.bf16.xpose.msra.mxu0 %v255
        %265 = vmatprep.subr.bf16.mxu0 0
        %266 = vmatpush1.bf16.xpose.msra.mxu0 %v256
        %267 = vmatprep.subr.bf16.mxu0 0
        %268 = vmatpush1.bf16.xpose.msra.mxu0 %v257
        %269 = vmatprep.subr.bf16.mxu0 0
        %270 = vmatpush1.bf16.xpose.msra.mxu0 %v258
        %271 = vmatprep.subr.bf16.mxu0 0
        %272 = vmatpush1.bf16.xpose.msra.mxu0 %v259
        %273 = vmatprep.subr.bf16.mxu0 0
        %274 = vmatpush1.bf16.xpose.msra.mxu0 %v260
        %275 = vmatprep.subr.bf16.mxu0 0
        %276 = vmatpush1.bf16.xpose.msra.mxu0 %v261
        %277 = vmatprep.subr.bf16.mxu0 0
        %278 = vmatpush1.bf16.xpose.msra.mxu0 %v262
        %279 = vmatprep.subr.bf16.mxu0 0
        %280 = vmatpush1.bf16.xpose.msra.mxu0 0
        %281 = vmatprep.subr.bf16.mxu0 0
        %282 = vmatpush1.bf16.xpose.msra.mxu0 0
        %283 = vmatprep.subr.bf16.mxu0 0
        %284 = vmatpush1.bf16.xpose.msra.mxu0 0
        %285 = vmatprep.subr.bf16.mxu0 0
        %286 = vmatpush1.bf16.xpose.msra.mxu0 0
        %287 = vmatprep.subr.bf16.mxu0 0
        %288 = vmatpush1.bf16.xpose.msra.mxu0 0
        %289 = vmatprep.subr.bf16.mxu0 0
        %290 = vmatpush1.bf16.xpose.msra.mxu0 0
        %291 = vmatprep.subr.bf16.mxu0 0
        %292 = vmatpush1.bf16.xpose.msra.mxu0 0
        %293 = vmatprep.subr.bf16.mxu0 0
        %294 = vmatpush1.bf16.xpose.msra.mxu0 0
        %295 = vmatprep.mubr.bf16.mxu0 0
        %296 = vmatmul.mubr.bf16.gmra.mrb[0].mxu0 %v238
        %v297 = vpop.f32.mrb[0].mxu0
        %v298 = vadd.f32 0.0, %v297
        %v299 = vpop.f32.mrb[0].mxu0
        %v300 = vpop.f32.mrb[0].mxu0
        %v301 = vpop.f32.mrb[0].mxu0
        %302 = vdwg.mxu0
        %303 = vst [vmem:[%s229] sm:$0xff] %v298
        %v304 = vlaneseq
        %v305 = vshrl.u32 %v304, 7
        %vm306 = vcmp.lt.s32.totalorder %v305, 4
        %v307 = vsel %vm306, %v298, -inf
        %v308 = vrot.slane %v307, 4
        %v309 = vmax.f32 %v307, %v308
        %v310 = vrot.slane %v309, 2
        %v311 = vmax.f32 %v309, %v310
        %v312 = vrot.slane %v311, 1
        %v313 = vmax.f32 %v311, %v312
        %314 = vst [vmem:[%s235] sm:$0x1] %v313
        %s315 = sand.u32 %s87, 1
        %s316 = scalar_lea.sflag [#allocation4], %s315
        %s317 = sand.u32 %s87, 1
        %s318 = smul.addr %s317, 8
        %s319 = scalar_lea.vmem [#allocation7], %s318
        %s320 = sand.u32 %s113, 1
        %s321 = scalar_lea.sflag [#allocation9], %s320
        %s322 = sand.u32 %s113, 1
        %s323 = scalar_lea.vmem [#allocation8], %s322
        // Predicated region
        $region37: #{tpu_custom_call.1} parent=27 // pred_check
          %p324 = pneg %p97
        $region38: #{tpu_custom_call.1} parent=27 // pred_check_branch
          %326 = sbr.rel (%p324) target = $region40
        $region39: #{tpu_custom_call.1} parent=27 // pred_region
          %s328 = ssub.s32 128, 128
          %329 = vsyncadd %s316, %s328
          %s330 = smul.addr %s27, 128
          %s331 = scalar_lea.hbm %s2, %s330
          %s333 = sshll.u32 %s319, 4
          %s334 = int_to_ptr.vmem [resolvable:$true] %s333
          %336 = dma.vmem_to_hbm [thread:$0]  %s334, 128, %s331, %s316
        $region40: #{tpu_custom_call.1} parent=27 // pred_fallthru
          _
        // Predicated region
        $region41: #{tpu_custom_call.1} parent=27 // pred_check
          %p337 = pneg %p123
        $region42: #{tpu_custom_call.1} parent=27 // pred_check_branch
          %339 = sbr.rel (%p337) target = $region44
        $region43: #{tpu_custom_call.1} parent=27 // pred_region
          %s341 = ssub.s32 16, 16
          %342 = vsyncadd %s321, %s341
          %s343 = smul.addr %s27, 16
          %s344 = scalar_lea.hbm %s3, %s343
          %s346 = sshll.u32 %s323, 4
          %s347 = int_to_ptr.vmem [resolvable:$true] %s346
          %349 = dma.vmem_to_hbm [thread:$0]  %s347, 16, %s344, %s321
        $region44: #{tpu_custom_call.1} parent=27 // pred_fallthru
          _
      $region28: #{tpu_custom_call.1} parent=5 // pred_fallthru
        _
      %p350 = scmp.le.s32.totalorder 2, %s22
      // Predicated region
      $region45: #{tpu_custom_call.1} parent=5 // pred_check
        %p351 = pneg %p350
      $region46: #{tpu_custom_call.1} parent=5 // pred_check_branch
        %353 = sbr.rel (%p351) target = $region48
      $region47: #{tpu_custom_call.1} parent=5 // pred_region
        %s354 = ssub.s32 %s22, 2
        // Predicated region
        $region49: #{tpu_custom_call.1} parent=47 // pred_check
          %p355 = pneg %p103
        $region50: #{tpu_custom_call.1} parent=47 // pred_check_branch
          %357 = sbr.rel (%p355) target = $region52
        $region51: #{tpu_custom_call.1} parent=47 // pred_region
          %s358 = sand.u32 %s88, 1
          %s359 = scalar_lea.sflag [#allocation4], %s358
          %s360 = sand.u32 %s88, 1
          %s361 = smul.addr %s360, 8
          %s362 = scalar_lea.vmem [#allocation7], %s361
          %363 = dma.done %s359, 128
        $region52: #{tpu_custom_call.1} parent=47 // pred_fallthru
          _
        // Predicated region
        $region53: #{tpu_custom_call.1} parent=47 // pred_check
          %p364 = pneg %p129
        $region54: #{tpu_custom_call.1} parent=47 // pred_check_branch
          %366 = sbr.rel (%p364) target = $region56
        $region55: #{tpu_custom_call.1} parent=47 // pred_region
          %s367 = sand.u32 %s114, 1
          %s368 = scalar_lea.sflag [#allocation9], %s367
          %s369 = sand.u32 %s114, 1
          %s370 = scalar_lea.vmem [#allocation8], %s369
          %371 = dma.done %s368, 16
        $region56: #{tpu_custom_call.1} parent=47 // pred_fallthru
          _
      $region48: #{tpu_custom_call.1} parent=5 // pred_fallthru
        _
    $region6: #{tpu_custom_call.1} parent=1 // loop_footer
      %s26 = sadd.s32 1, %s22
    $region7: #{tpu_custom_call.1} parent=1 // loop_footer_branch
      %21 = sbr.rel target = $region3
    $region8: #{tpu_custom_call.1} parent=1 // loop_exit
      _
    %372 = vsyncpa [#allocation3], 1
    %s373 = scalar_lea.sflag [#allocation3], 1
    %374 = vsyncpa %s373, 1
    %375 = vsyncpa [#allocation6], 1
    %s376 = scalar_lea.sflag [#allocation6], 1
    %377 = vsyncpa %s376, 1
    %378 = vsyncpa [#allocation4], 1
    %s379 = scalar_lea.sflag [#allocation4], 1
    %380 = vsyncpa %s379, 1
    %381 = vsyncpa [#allocation9], 1
    %s382 = scalar_lea.sflag [#allocation9], 1
    %383 = vsyncpa %s382, 1

</llo_original>
